<compile_context>
chip_gen: v7x
topology: tpu7x:2x2x1
jax: 0.10.0
libtpu: 0.0.40
codegen_flags: <defaults>
</compile_context>

<pallas_src>
import functools
import math

import jax
import jax.numpy as jnp
from jax.experimental import pallas as pl
from jax.experimental.pallas import tpu as pltpu


def _mlp_kernel(*refs, num_hidden_layers: int, output_size: int, use_sigmoid: bool):
    """refs = (x, W_in, b_in, [W_h, b_h]*num_hidden_layers, W_out, b_out, out).

    x arrives in bf16; MXU-layer weights are bf16 in [in, out] layout; biases
    are f32 [1, out].  When output_size == 1 the final weight arrives
    pre-transposed as f32 [1, num_neurons] and is applied as a VPU multiply +
    lane reduction (avoids a 1/128-utilized MXU matmul ending in a masked
    partial store).
    """
    x_ref = refs[0]
    out_ref = refs[-1]
    p = refs[1:-1]

    def dense_relu(h, w_ref, b_ref, out_dtype):
        w = w_ref[...]  # bf16
        acc = jnp.dot(h.astype(w.dtype), w, preferred_element_type=jnp.float32)
        # f32 bias-add + ReLU on VPU; cast down only when the result feeds
        # another MXU layer (no extra numerics change, halves live footprint).
        return jnp.maximum(acc + b_ref[...], 0.0).astype(out_dtype)

    # Input layer + hidden layers (statically unrolled; num_hidden_layers is a
    # Python constant so this traces into straight-line MXU matmuls).
    n_relu_layers = 1 + num_hidden_layers
    h = x_ref[...]  # bf16
    for li in range(n_relu_layers):
        feeds_mxu = (li < n_relu_layers - 1) or (output_size != 1)
        act_dtype = jnp.bfloat16 if feeds_mxu else jnp.float32
        h = dense_relu(h, p[2 * li], p[2 * li + 1], act_dtype)

    # Output layer (no ReLU).
    w_out_ref, b_out_ref = p[-2], p[-1]
    if output_size == 1:
        # [tile_m, H] * [1, H] -> lane reduce -> [tile_m, 1] on VPU/XLU.
        y = jnp.sum(h * w_out_ref[...], axis=-1, keepdims=True) + b_out_ref[...]
    else:
        w = w_out_ref[...]
        y = jnp.dot(h.astype(w.dtype), w, preferred_element_type=jnp.float32) + b_out_ref[...]

    if use_sigmoid:
        y = jax.nn.sigmoid(y)  # f32, exp/recip on EUP

    out_ref[...] = y.astype(out_ref.dtype)


def _round_up(a: int, b: int) -> int:
    return -(-a // b) * b


def _choose_tile_m(n: int, d: int) -> int:
    """Batch-tile size: multiple of 16 (bf16 sublane packing), as large as the
    VMEM guard allows (cap 1024), but small enough to leave >= 2 grid steps so
    the parallel axis shards across both v7x TensorCores."""
    n16 = _round_up(max(n, 1), 16)
    # Keep the double-buffered bf16 x block under ~16 MiB.
    by_vmem = max(16, (((16 << 20) // max(1, 2 * d * 2)) // 16) * 16)
    cap = max(16, min(1024, by_vmem))
    if n16 >= 32:
        tile_m = max(16, min(cap, (n16 // 2 // 16) * 16))
    else:
        tile_m = min(n16, cap)
    return tile_m


def _vmem_ceiling_bytes() -> int:
    """Generation-aware VMEM request ceiling: ~100 MiB on v5e/v6e (128 MiB
    physical), ~80% of capacity on v7x (64 MiB physical)."""
    try:
        info = pltpu.get_tpu_info()
        cap = int(getattr(info, "vmem_capacity_bytes", 128 << 20))
    except Exception:
        cap = 128 << 20
    return int(min(100 << 20, (cap * 4) // 5))


def feature_regressor_forward(x, params, *, num_hidden_layers, output_size, use_sigmoid):
    """Forward pass matching FeatureRegressor.forward.

    Args:
      x:       [N, 1, H, W] float32 (NCHW like the PyTorch module).
      params:  flat f32 list [W_in, b_in, (W_h, b_h)*num_hidden_layers, W_out, b_out],
               weights in [in, out] layout, biases as [1, out].
    Returns:
      [N * output_size] (torch.flatten(x) semantics; [N] when output_size == 1).
    """
    n = x.shape[0]
    d = int(math.prod(x.shape[1:]))
    num_neurons = params[0].shape[1]

    # torch.flatten(x, 1); streamed as bf16 (cast to bf16 before the MXU anyway).
    x2d = x.reshape(n, d).astype(jnp.bfloat16)

    tile_m = _choose_tile_m(n, d)
    n_pad = _round_up(n, tile_m)
    if n_pad != n:
        x2d = jnp.pad(x2d, ((0, n_pad - n), (0, 0)))
    grid = (n_pad // tile_m,)

    # Kernel-side parameters: bf16 weights for MXU layers, f32 biases; final
    # weight pre-transposed to [1, H] (f32) when output_size == 1.
    kparams = []
    mm_layers = [(params[0], params[1])]
    for i in range(num_hidden_layers):
        mm_layers.append((params[2 + 2 * i], params[3 + 2 * i]))
    for w, b in mm_layers:
        kparams.append(w.astype(jnp.bfloat16))
        kparams.append(b.astype(jnp.float32))
    w_out, b_out = params[-2], params[-1]
    if output_size == 1:
        kparams.append(w_out.astype(jnp.float32).T)  # [1, num_neurons]
    else:
        kparams.append(w_out.astype(jnp.bfloat16))
    kparams.append(b_out.astype(jnp.float32))

    kernel = functools.partial(
        _mlp_kernel,
        num_hidden_layers=num_hidden_layers,
        output_size=output_size,
        use_sigmoid=use_sigmoid,
    )

    # x / out are tiled along the batch; weights & biases use full-shape blocks
    # with constant index_maps so they stay VMEM-resident across grid steps
    # (Mosaic skips the re-fetch; their second buffer is counted in the budget).
    # TODO(synk): for very large d on v7x, add an "arbitrary" K grid axis for the
    # input layer instead of keeping the full (tile_m, d) block + W_in resident.
    in_specs = [pl.BlockSpec((tile_m, d), lambda i: (i, 0))]
    for kp_arr in kparams:
        in_specs.append(pl.BlockSpec(kp_arr.shape, lambda i: (0, 0)))
    out_specs = pl.BlockSpec((tile_m, output_size), lambda i: (i, 0))

    # Explicit VMEM budget: double-buffered operands + activation headroom,
    # clamped to a generation-aware ceiling (never above v7x's physical VMEM).
    param_bytes = sum(int(math.prod(p_.shape)) * p_.dtype.itemsize for p_ in kparams)
    x_block_bytes = tile_m * d * 2                    # bf16 input block
    out_block_bytes = tile_m * output_size * 4
    act_bytes = 4 * tile_m * max(d, num_neurons) * 4  # f32 accumulator headroom
    vmem_limit = 2 * (x_block_bytes + param_bytes + out_block_bytes) + act_bytes + (2 << 20)
    ceiling = _vmem_ceiling_bytes()
    vmem_limit = int(min(max(vmem_limit, min(32 << 20, ceiling)), ceiling))

    # Advisory cost hint for the XLA scheduler around the custom call.
    dims = [d] + [num_neurons] * (num_hidden_layers + 1) + [output_size]
    flops = 2 * n_pad * sum(a * b for a, b in zip(dims[:-1], dims[1:]))
    bytes_accessed = n_pad * d * 2 + param_bytes + n_pad * output_size * 4
    transcendentals = n_pad * output_size if use_sigmoid else 0

    out2d = pl.pallas_call(
        kernel,
        out_shape=jax.ShapeDtypeStruct((n_pad, output_size), jnp.float32),
        grid=grid,
        in_specs=in_specs,
        out_specs=out_specs,
        compiler_params=pltpu.CompilerParams(
            dimension_semantics=("parallel",),
            vmem_limit_bytes=vmem_limit,
        ),
        cost_estimate=pl.CostEstimate(
            flops=int(flops),
            transcendentals=int(transcendentals),
            bytes_accessed=int(bytes_accessed),
        ),
    )(x2d, *kparams)

    return out2d[:n].reshape(-1)  # torch.flatten(x)


def init_params(key, input_size, num_neurons, num_hidden_layers, output_size):
    """Deterministic synthetic parameters (uniform, torch-Linear-like fan-in scale), f32."""
    params = []

    def linear(key, fan_in, fan_out):
        kw, kb = jax.random.split(key)
        bound = 1.0 / jnp.sqrt(jnp.float32(fan_in))
        w = jax.random.uniform(kw, (fan_in, fan_out), jnp.float32, -bound, bound)
        b = jax.random.uniform(kb, (1, fan_out), jnp.float32, -bound, bound)
        return w, b

    keys = jax.random.split(key, num_hidden_layers + 2)
    params.extend(linear(keys[0], input_size, num_neurons))
    for i in range(num_hidden_layers):
        params.extend(linear(keys[1 + i], num_neurons, num_neurons))
    params.extend(linear(keys[-1], num_neurons, output_size))
    return params


def reference_forward(x, params, *, num_hidden_layers, use_sigmoid):
    """Pure-JAX f32 reference matching the PyTorch forward, for verification."""
    n = x.shape[0]
    h = x.reshape(n, -1).astype(jnp.float32)
    h = jnp.maximum(h @ params[0] + params[1], 0.0)
    for i in range(num_hidden_layers):
        h = jnp.maximum(h @ params[2 + 2 * i] + params[3 + 2 * i], 0.0)
    y = h @ params[-2] + params[-1]
    if use_sigmoid:
        y = jax.nn.sigmoid(y)
    return y.reshape(-1)


if __name__ == "__main__":
    # Small shapes consistent with the module: image_size=(16,16), 1 channel
    # -> input_size = 256; num_neurons = 128; one hidden layer; scalar output.
    image_size = (16, 16)
    input_size = image_size[0] * image_size[1]
    num_neurons = 128
    num_hidden_layers = 1
    output_size = 1
    use_sigmoid = True

    key = jax.random.PRNGKey(0)
    kx, kp, kx2 = jax.random.split(key, 3)
    params = init_params(kp, input_size, num_neurons, num_hidden_layers, output_size)

    # Primary check: tiny batch (single grid step).
    batch = 2
    x = jax.random.normal(kx, (batch, 1, image_size[0], image_size[1]), jnp.float32)
    out = feature_regressor_forward(
        x, params,
        num_hidden_layers=num_hidden_layers,
        output_size=output_size,
        use_sigmoid=use_sigmoid,
    )
    out = jax.block_until_ready(out)
    ref = reference_forward(
        x, params, num_hidden_layers=num_hidden_layers, use_sigmoid=use_sigmoid
    )
    assert out.shape == (batch,), out.shape
    # bf16 weight/input streaming introduces ~1e-3-level error (accumulation stays f32).
    assert jnp.allclose(out, ref, atol=1e-2, rtol=1e-2), (out, ref)

    # Secondary check: batch that exercises multi-step grid + padding path.
    batch2 = 40
    x2 = jax.random.normal(kx2, (batch2, 1, image_size[0], image_size[1]), jnp.float32)
    out2 = feature_regressor_forward(
        x2, params,
        num_hidden_layers=num_hidden_layers,
        output_size=output_size,
        use_sigmoid=use_sigmoid,
    )
    out2 = jax.block_until_ready(out2)
    ref2 = reference_forward(
        x2, params, num_hidden_layers=num_hidden_layers, use_sigmoid=use_sigmoid
    )
    assert out2.shape == (batch2,), out2.shape
    assert jnp.allclose(out2, ref2, atol=1e-2, rtol=1e-2), (out2, ref2)

    print("KERNEL_OK")
</pallas_src>

<mosaic_0001>
module attributes {stable_mosaic.version = 11 : i64} {
  func.func @_mlp_kernel(%arg0: i32, %arg1: memref<16x256xbf16, #tpu.memory_space<vmem>>, %arg2: memref<256x128xbf16, #tpu.memory_space<vmem>>, %arg3: memref<1x128xf32, #tpu.memory_space<vmem>>, %arg4: memref<128x128xbf16, #tpu.memory_space<vmem>>, %arg5: memref<1x128xf32, #tpu.memory_space<vmem>>, %arg6: memref<1x128xf32, #tpu.memory_space<vmem>>, %arg7: memref<1x1xf32, #tpu.memory_space<vmem>>, %arg8: memref<16x1xf32, #tpu.memory_space<vmem>>) attributes {dimension_semantics = [#tpu.dimension_semantics<parallel>], iteration_bounds = array<i64: 1>, scalar_prefetch = 0 : i64, scratch_operands = 0 : i64, tpu.core_type = #tpu.core_type<tc>, window_params = [{transform_indices = @transform_0, window_bounds = array<i64: 16, 256>}, {pipeline_mode = #tpu.pipeline_mode<synchronous>, transform_indices = @transform_1, window_bounds = array<i64: 256, 128>}, {pipeline_mode = #tpu.pipeline_mode<synchronous>, transform_indices = @transform_2, window_bounds = array<i64: 1, 128>}, {pipeline_mode = #tpu.pipeline_mode<synchronous>, transform_indices = @transform_3, window_bounds = array<i64: 128, 128>}, {pipeline_mode = #tpu.pipeline_mode<synchronous>, transform_indices = @transform_4, window_bounds = array<i64: 1, 128>}, {pipeline_mode = #tpu.pipeline_mode<synchronous>, transform_indices = @transform_5, window_bounds = array<i64: 1, 128>}, {pipeline_mode = #tpu.pipeline_mode<synchronous>, transform_indices = @transform_6, window_bounds = array<i64: 1, 1>}, {transform_indices = @transform_7, window_bounds = array<i64: 16, 1>}]} {
    %c0 = arith.constant 0 : index
    %c0_0 = arith.constant 0 : index
    %0 = vector.load %arg1[%c0, %c0_0] : memref<16x256xbf16, #tpu.memory_space<vmem>>, vector<16x256xbf16>
    %c0_1 = arith.constant 0 : index
    %c0_2 = arith.constant 0 : index
    %1 = vector.load %arg2[%c0_1, %c0_2] : memref<256x128xbf16, #tpu.memory_space<vmem>>, vector<256x128xbf16>
    %cst = arith.constant dense<0.000000e+00> : vector<16x128xf32>
    %2 = tpu.matmul %0, %1, %cst {dimension_numbers = #tpu.dot_dimension_numbers<[1], [0], [0], [1], [0, 0, 1, 1], [], []>} : vector<16x256xbf16>, vector<256x128xbf16>, vector<16x128xf32> -> vector<16x128xf32>
    %c0_3 = arith.constant 0 : index
    %c0_4 = arith.constant 0 : index
    %3 = vector.load %arg3[%c0_3, %c0_4] : memref<1x128xf32, #tpu.memory_space<vmem>>, vector<1x128xf32>
    %4 = vector.broadcast %3 : vector<1x128xf32> to vector<16x128xf32>
    %5 = arith.addf %2, %4 : vector<16x128xf32>
    %cst_5 = arith.constant 0.000000e+00 : f32
    %6 = vector.broadcast %cst_5 : f32 to vector<16x128xf32>
    %7 = arith.maximumf %5, %6 : vector<16x128xf32>
    %8 = arith.truncf %7 : vector<16x128xf32> to vector<16x128xbf16>
    %c0_6 = arith.constant 0 : index
    %c0_7 = arith.constant 0 : index
    %9 = vector.load %arg4[%c0_6, %c0_7] : memref<128x128xbf16, #tpu.memory_space<vmem>>, vector<128x128xbf16>
    %cst_8 = arith.constant dense<0.000000e+00> : vector<16x128xf32>
    %10 = tpu.matmul %8, %9, %cst_8 {dimension_numbers = #tpu.dot_dimension_numbers<[1], [0], [0], [1], [0, 0, 1, 1], [], []>} : vector<16x128xbf16>, vector<128x128xbf16>, vector<16x128xf32> -> vector<16x128xf32>
    %c0_9 = arith.constant 0 : index
    %c0_10 = arith.constant 0 : index
    %11 = vector.load %arg5[%c0_9, %c0_10] : memref<1x128xf32, #tpu.memory_space<vmem>>, vector<1x128xf32>
    %12 = vector.broadcast %11 : vector<1x128xf32> to vector<16x128xf32>
    %13 = arith.addf %10, %12 : vector<16x128xf32>
    %cst_11 = arith.constant 0.000000e+00 : f32
    %14 = vector.broadcast %cst_11 : f32 to vector<16x128xf32>
    %15 = arith.maximumf %13, %14 : vector<16x128xf32>
    %c0_12 = arith.constant 0 : index
    %c0_13 = arith.constant 0 : index
    %16 = vector.load %arg6[%c0_12, %c0_13] : memref<1x128xf32, #tpu.memory_space<vmem>>, vector<1x128xf32>
    %17 = vector.broadcast %16 : vector<1x128xf32> to vector<16x128xf32>
    %18 = arith.mulf %15, %17 : vector<16x128xf32>
    %cst_14 = arith.constant dense<0.000000e+00> : vector<16xf32>
    %19 = vector.multi_reduction <add>, %18, %cst_14 [1] : vector<16x128xf32> to vector<16xf32>
    %20 = vector.shape_cast %19 : vector<16xf32> to vector<16x1xf32>
    %c0_15 = arith.constant 0 : index
    %c0_16 = arith.constant 0 : index
    %21 = vector.load %arg7[%c0_15, %c0_16] : memref<1x1xf32, #tpu.memory_space<vmem>>, vector<1x1xf32>
    %22 = vector.broadcast %21 : vector<1x1xf32> to vector<16x1xf32>
    %23 = arith.addf %20, %22 : vector<16x1xf32>
    %24 = arith.negf %23 : vector<16x1xf32>
    %25 = math.exp %24 : vector<16x1xf32>
    %cst_17 = arith.constant 1.000000e+00 : f32
    %26 = vector.broadcast %cst_17 : f32 to vector<16x1xf32>
    %27 = arith.addf %26, %25 : vector<16x1xf32>
    %28 = arith.divf %26, %27 : vector<16x1xf32>
    %c0_18 = arith.constant 0 : index
    %c0_19 = arith.constant 0 : index
    %29 = vector.load %arg8[%c0_18, %c0_19] : memref<16x1xf32, #tpu.memory_space<vmem>>, vector<16x1xf32>
    tpu.vector_store %arg8[%c0_18, %c0_19], %28 {strides = array<i32>} : memref<16x1xf32, #tpu.memory_space<vmem>>, vector<16x1xf32>,
    return
  }
  func.func @transform_0(%arg0: i32) -> (i32, i32) {
    %c0_i32 = arith.constant 0 : i32
    %c0_i32_0 = arith.constant 0 : i32
    return %arg0, %c0_i32 : i32, i32
  }
  func.func @transform_1(%arg0: i32) -> (i32, i32) {
    %c0_i32 = arith.constant 0 : i32
    %c0_i32_0 = arith.constant 0 : i32
    %c0_i32_1 = arith.constant 0 : i32
    return %c0_i32, %c0_i32_0 : i32, i32
  }
  func.func @transform_2(%arg0: i32) -> (i32, i32) {
    %c0_i32 = arith.constant 0 : i32
    %c0_i32_0 = arith.constant 0 : i32
    %c0_i32_1 = arith.constant 0 : i32
    return %c0_i32, %c0_i32_0 : i32, i32
  }
  func.func @transform_3(%arg0: i32) -> (i32, i32) {
    %c0_i32 = arith.constant 0 : i32
    %c0_i32_0 = arith.constant 0 : i32
    %c0_i32_1 = arith.constant 0 : i32
    return %c0_i32, %c0_i32_0 : i32, i32
  }
  func.func @transform_4(%arg0: i32) -> (i32, i32) {
    %c0_i32 = arith.constant 0 : i32
    %c0_i32_0 = arith.constant 0 : i32
    %c0_i32_1 = arith.constant 0 : i32
    return %c0_i32, %c0_i32_0 : i32, i32
  }
  func.func @transform_5(%arg0: i32) -> (i32, i32) {
    %c0_i32 = arith.constant 0 : i32
    %c0_i32_0 = arith.constant 0 : i32
    %c0_i32_1 = arith.constant 0 : i32
    return %c0_i32, %c0_i32_0 : i32, i32
  }
  func.func @transform_6(%arg0: i32) -> (i32, i32) {
    %c0_i32 = arith.constant 0 : i32
    %c0_i32_0 = arith.constant 0 : i32
    %c0_i32_1 = arith.constant 0 : i32
    return %c0_i32, %c0_i32_0 : i32, i32
  }
  func.func @transform_7(%arg0: i32) -> (i32, i32) {
    %c0_i32 = arith.constant 0 : i32
    %c0_i32_0 = arith.constant 0 : i32
    return %arg0, %c0_i32 : i32, i32
  }
}

</mosaic_0001>

<llo_original>
// kernel: tpu_custom_call.1
$region0: #{tpu_custom_call.1}
  #allocation0 [shape = 'u32[]', space=smem, size = 0x4, offset = 0x4, fixed_abs, tag = 'smem constant byte address 0x4 - core index']
  #allocation1 [shape = 'u32[144,128]{1,0:T(1,128)}', space=vmem, size = 0x12000, scoped, tag = 'internal scratch']
  #allocation2 [shape = 'f32[1,1]{1,0:T(1,128)S(1)}', space=vmem, size = 0x200, scoped, tag = 'scoped memory for tpu_custom_call.1']
  %s0 = inlined_call_operand.hbm [shape: bf16[16,256], index: 0, kind: input, shape index: {}]
  %s1 = inlined_call_operand.hbm [shape: bf16[256,128], index: 1, kind: input, shape index: {}]
  %s2 = inlined_call_operand.vmem [shape: f32[1,128], index: 2, kind: input, shape index: {}]
  %s3 = inlined_call_operand.hbm [shape: bf16[128,128], index: 3, kind: input, shape index: {}]
  %s4 = inlined_call_operand.vmem [shape: f32[1,128], index: 4, kind: input, shape index: {}]
  %s5 = inlined_call_operand.vmem [shape: f32[1,128], index: 5, kind: input, shape index: {}]
  %s6 = inlined_call_operand.<no memory space> [shape: f32[1,1], index: 6, kind: input, shape index: {}]
  %s7 = inlined_call_operand.vmem [shape: f32[16,1], index: 7, kind: output, shape index: {}]
  %s8 = sld [smem:[#allocation0]]
  $region50: #{tpu_custom_call.1} parent=0
    _
  %s10 = ssub.s32 1, %s8
  %s11 = scalar_select 0, %s10, %s8
  %v12 = vstv %s6
  %13 = vst [vmem:[#allocation2] sm:$0x1] %v12
  $region1: #{tpu_custom_call.1} parent=0
    #allocation3 [shape = 'u8[8192]{0}', space=vmem, size = 0x2000, scoped, tag = 'input window, operand 0, single buffered']
    #allocation4 [shape = 's32[1]{0}', space=sflag, size = 0x4, scoped, tag = 'scoped memory for tpu_custom_call.1']
    #allocation5 [shape = 'u8[65536]{0}', space=vmem, size = 0x10000, scoped, tag = 'input window, operand 1, single buffered']
    #allocation6 [shape = 's32[1]{0}', space=sflag, size = 0x4, scoped, tag = 'scoped memory for tpu_custom_call.1']
    #allocation7 [shape = 'u8[32768]{0}', space=vmem, size = 0x8000, scoped, tag = 'input window, operand 3, single buffered']
    %14 = vsyncpa [#allocation4], 0
    %15 = vsyncpa [#allocation6], 0
    // Predicated region
    $region2: #{tpu_custom_call.1} parent=1 // pred_check
      _
    $region3: #{tpu_custom_call.1} parent=1 // pred_check_branch
      %17 = sbr.rel (0) target = $region5
    $region4: #{tpu_custom_call.1} parent=1 // pred_region
      %s19 = ssub.s32 256, 256
      %20 = vsyncadd [#allocation4], %s19
      %s21 = sshll.u32 [#allocation3], 4
      %s22 = int_to_ptr.vmem [resolvable:$true] %s21
      %27 = dma.hbm_to_vmem [thread:$0]  %s0, 256, %s22, [#allocation4], 128, 128, 8
    $region5: #{tpu_custom_call.1} parent=1 // pred_fallthru
      _
    // Predicated region
    $region6: #{tpu_custom_call.1} parent=1 // pred_check
      _
    $region7: #{tpu_custom_call.1} parent=1 // pred_check_branch
      %29 = sbr.rel (0) target = $region9
    $region8: #{tpu_custom_call.1} parent=1 // pred_region
      %s31 = ssub.s32 2048, 2048
      %32 = vsyncadd [#allocation6], %s31
      %s33 = sshll.u32 [#allocation5], 4
      %s34 = int_to_ptr.vmem [resolvable:$true] %s33
      %39 = dma.hbm_to_vmem [thread:$0]  %s1, 2048, %s34, [#allocation6], 64, 64, 4
    $region9: #{tpu_custom_call.1} parent=1 // pred_fallthru
      _
    // Predicated region
    $region10: #{tpu_custom_call.1} parent=1 // pred_check
      _
    $region11: #{tpu_custom_call.1} parent=1 // pred_check_branch
      %41 = sbr.rel (0) target = $region13
    $region12: #{tpu_custom_call.1} parent=1 // pred_region
      _
    $region13: #{tpu_custom_call.1} parent=1 // pred_fallthru
      _
    // Predicated region
    $region14: #{tpu_custom_call.1} parent=1 // pred_check
      _
    $region15: #{tpu_custom_call.1} parent=1 // pred_check_branch
      %43 = sbr.rel (0) target = $region17
    $region16: #{tpu_custom_call.1} parent=1 // pred_region
      %s45 = ssub.s32 1024, 1024
      %46 = vsyncadd [#allocation6], %s45
      %s47 = sshll.u32 [#allocation7], 4
      %s48 = int_to_ptr.vmem [resolvable:$true] %s47
      %53 = dma.hbm_to_vmem [thread:$0]  %s3, 1024, %s48, [#allocation6], 64, 64, 4
    $region17: #{tpu_custom_call.1} parent=1 // pred_fallthru
      _
    // Predicated region
    $region18: #{tpu_custom_call.1} parent=1 // pred_check
      _
    $region19: #{tpu_custom_call.1} parent=1 // pred_check_branch
      %55 = sbr.rel (0) target = $region21
    $region20: #{tpu_custom_call.1} parent=1 // pred_region
      _
    $region21: #{tpu_custom_call.1} parent=1 // pred_fallthru
      _
    // Predicated region
    $region22: #{tpu_custom_call.1} parent=1 // pred_check
      _
    $region23: #{tpu_custom_call.1} parent=1 // pred_check_branch
      %57 = sbr.rel (0) target = $region25
    $region24: #{tpu_custom_call.1} parent=1 // pred_region
      _
    $region25: #{tpu_custom_call.1} parent=1 // pred_fallthru
      _
    // Predicated region
    $region26: #{tpu_custom_call.1} parent=1 // pred_check
      _
    $region27: #{tpu_custom_call.1} parent=1 // pred_check_branch
      %59 = sbr.rel (0) target = $region29
    $region28: #{tpu_custom_call.1} parent=1 // pred_region
      _
    $region29: #{tpu_custom_call.1} parent=1 // pred_fallthru
      _
    // Predicated region
    $region30: #{tpu_custom_call.1} parent=1 // pred_check
      _
    $region31: #{tpu_custom_call.1} parent=1 // pred_check_branch
      %61 = sbr.rel (0) target = $region33
    $region32: #{tpu_custom_call.1} parent=1 // pred_region
      %62 = dma.done [#allocation4], 256
    $region33: #{tpu_custom_call.1} parent=1 // pred_fallthru
      _
    // Predicated region
    $region34: #{tpu_custom_call.1} parent=1 // pred_check
      _
    $region35: #{tpu_custom_call.1} parent=1 // pred_check_branch
      %64 = sbr.rel (0) target = $region37
    $region36: #{tpu_custom_call.1} parent=1 // pred_region
      %65 = dma.done [#allocation6], 2048
    $region37: #{tpu_custom_call.1} parent=1 // pred_fallthru
      _
    // Predicated region
    $region38: #{tpu_custom_call.1} parent=1 // pred_check
      _
    $region39: #{tpu_custom_call.1} parent=1 // pred_check_branch
      %67 = sbr.rel (0) target = $region41
    $region40: #{tpu_custom_call.1} parent=1 // pred_region
      %68 = dma.done [#allocation6], 1024
    $region41: #{tpu_custom_call.1} parent=1 // pred_fallthru
      _
    %v70 = vld [vmem:[#allocation3] sm:$0xff]
    %v71 = vld [vmem:[#allocation3 + $0x8] sm:$0xff]
    %v72 = vld [vmem:[#allocation5] sm:$0xf]
    %v73 = vld [vmem:[#allocation5 + $0x4] sm:$0xf]
    %v74 = vld [vmem:[#allocation5 + $0x8] sm:$0xf]
    %v75 = vld [vmem:[#allocation5 + $0xc] sm:$0xf]
    %v76 = vld [vmem:[#allocation5 + $0x10] sm:$0xf]
    %v77 = vld [vmem:[#allocation5 + $0x14] sm:$0xf]
    %v78 = vld [vmem:[#allocation5 + $0x18] sm:$0xf]
    %v79 = vld [vmem:[#allocation5 + $0x1c] sm:$0xf]
    %v80 = vld [vmem:[#allocation5 + $0x20] sm:$0xf]
    %v81 = vld [vmem:[#allocation5 + $0x24] sm:$0xf]
    %v82 = vld [vmem:[#allocation5 + $0x28] sm:$0xf]
    %v83 = vld [vmem:[#allocation5 + $0x2c] sm:$0xf]
    %v84 = vld [vmem:[#allocation5 + $0x30] sm:$0xf]
    %v85 = vld [vmem:[#allocation5 + $0x34] sm:$0xf]
    %v86 = vld [vmem:[#allocation5 + $0x38] sm:$0xf]
    %v87 = vld [vmem:[#allocation5 + $0x3c] sm:$0xf]
    %v88 = vld [vmem:[#allocation5 + $0x40] sm:$0xf]
    %v89 = vld [vmem:[#allocation5 + $0x44] sm:$0xf]
    %v90 = vld [vmem:[#allocation5 + $0x48] sm:$0xf]
    %v91 = vld [vmem:[#allocation5 + $0x4c] sm:$0xf]
    %v92 = vld [vmem:[#allocation5 + $0x50] sm:$0xf]
    %v93 = vld [vmem:[#allocation5 + $0x54] sm:$0xf]
    %v94 = vld [vmem:[#allocation5 + $0x58] sm:$0xf]
    %v95 = vld [vmem:[#allocation5 + $0x5c] sm:$0xf]
    %v96 = vld [vmem:[#allocation5 + $0x60] sm:$0xf]
    %v97 = vld [vmem:[#allocation5 + $0x64] sm:$0xf]
    %v98 = vld [vmem:[#allocation5 + $0x68] sm:$0xf]
    %v99 = vld [vmem:[#allocation5 + $0x6c] sm:$0xf]
    %v100 = vld [vmem:[#allocation5 + $0x70] sm:$0xf]
    %v101 = vld [vmem:[#allocation5 + $0x74] sm:$0xf]
    %v102 = vld [vmem:[#allocation5 + $0x78] sm:$0xf]
    %v103 = vld [vmem:[#allocation5 + $0x7c] sm:$0xf]
    %v104 = vld [vmem:[%s2] sm:$0x1]
    %v106 = vlaneseq
    %v107 = vshrl.u32 %v106, 7
    %v108 = vsub.s32 0, %v107
    %v109 = vrot.slane %v104, %v108
    %v113 = vunpack.c.l.b16 %v70
    %v114 = vunpack.c.h.b16 %v70
    %v115 = vunpack.c.l.b16 %v71
    %v116 = vunpack.c.h.b16 %v71
    %v117 = vpack.c.b16 %v115, %v113
    %v118 = vpack.c.b16 %v116, %v114
    %v153 = vunpack.c.l.b16 %v72
    %v154 = vunpack.c.l.b16 %v73
    %v155 = vunpack.c.l.b16 %v74
    %v156 = vunpack.c.l.b16 %v75
    %v157 = vunpack.c.l.b16 %v76
    %v158 = vunpack.c.l.b16 %v77
    %v159 = vunpack.c.l.b16 %v78
    %v160 = vunpack.c.l.b16 %v79
    %v161 = vunpack.c.l.b16 %v80
    %v162 = vunpack.c.l.b16 %v81
    %v163 = vunpack.c.l.b16 %v82
    %v164 = vunpack.c.l.b16 %v83
    %v165 = vunpack.c.l.b16 %v84
    %v166 = vunpack.c.l.b16 %v85
    %v167 = vunpack.c.l.b16 %v86
    %v168 = vunpack.c.l.b16 %v87
    %v169 = vunpack.c.l.b16 %v88
    %v170 = vunpack.c.l.b16 %v89
    %v171 = vunpack.c.l.b16 %v90
    %v172 = vunpack.c.l.b16 %v91
    %v173 = vunpack.c.l.b16 %v92
    %v174 = vunpack.c.l.b16 %v93
    %v175 = vunpack.c.l.b16 %v94
    %v176 = vunpack.c.l.b16 %v95
    %v177 = vunpack.c.l.b16 %v96
    %v178 = vunpack.c.l.b16 %v97
    %v179 = vunpack.c.l.b16 %v98
    %v180 = vunpack.c.l.b16 %v99
    %v181 = vunpack.c.l.b16 %v100
    %v182 = vunpack.c.l.b16 %v101
    %v183 = vunpack.c.l.b16 %v102
    %v184 = vunpack.c.l.b16 %v103
    %v185 = vpack.c.b16 %v154, %v153
    %v186 = vpack.c.b16 %v156, %v155
    %v187 = vpack.c.b16 %v158, %v157
    %v188 = vpack.c.b16 %v160, %v159
    %v189 = vpack.c.b16 %v162, %v161
    %v190 = vpack.c.b16 %v164, %v163
    %v191 = vpack.c.b16 %v166, %v165
    %v192 = vpack.c.b16 %v168, %v167
    %v193 = vpack.c.b16 %v170, %v169
    %v194 = vpack.c.b16 %v172, %v171
    %v195 = vpack.c.b16 %v174, %v173
    %v196 = vpack.c.b16 %v176, %v175
    %v197 = vpack.c.b16 %v178, %v177
    %v198 = vpack.c.b16 %v180, %v179
    %v199 = vpack.c.b16 %v182, %v181
    %v200 = vpack.c.b16 %v184, %v183
    %217 = vmatprep.subr.bf16.mxu0 0
    %218 = vmatpush1.bf16.msra.mxu0 %v185
    %219 = vmatprep.subr.bf16.mxu0 0
    %220 = vmatpush1.bf16.msra.mxu0 %v186
    %221 = vmatprep.subr.bf16.mxu0 0
    %222 = vmatpush1.bf16.msra.mxu0 %v187
    %223 = vmatprep.subr.bf16.mxu0 0
    %224 = vmatpush1.bf16.msra.mxu0 %v188
    %225 = vmatprep.subr.bf16.mxu0 0
    %226 = vmatpush1.bf16.msra.mxu0 %v189
    %227 = vmatprep.subr.bf16.mxu0 0
    %228 = vmatpush1.bf16.msra.mxu0 %v190
    %229 = vmatprep.subr.bf16.mxu0 0
    %230 = vmatpush1.bf16.msra.mxu0 %v191
    %231 = vmatprep.subr.bf16.mxu0 0
    %232 = vmatpush1.bf16.msra.mxu0 %v192
    %233 = vmatprep.subr.bf16.mxu0 0
    %234 = vmatpush1.bf16.msra.mxu0 %v193
    %235 = vmatprep.subr.bf16.mxu0 0
    %236 = vmatpush1.bf16.msra.mxu0 %v194
    %237 = vmatprep.subr.bf16.mxu0 0
    %238 = vmatpush1.bf16.msra.mxu0 %v195
    %239 = vmatprep.subr.bf16.mxu0 0
    %240 = vmatpush1.bf16.msra.mxu0 %v196
    %241 = vmatprep.subr.bf16.mxu0 0
    %242 = vmatpush1.bf16.msra.mxu0 %v197
    %243 = vmatprep.subr.bf16.mxu0 0
    %244 = vmatpush1.bf16.msra.mxu0 %v198
    %245 = vmatprep.subr.bf16.mxu0 0
    %246 = vmatpush1.bf16.msra.mxu0 %v199
    %247 = vmatprep.subr.bf16.mxu0 0
    %248 = vmatpush1.bf16.msra.mxu0 %v200
    %249 = vmatprep.mubr.bf16.mxu0 %v118
    %250 = vmatmul.mubr.bf16.gmra.mrb[0].mxu0 %v117
    %v251 = vpop.f32.mrb[0].mxu0
    %v252 = vadd.f32 %v109, %v251
    %v253 = vpop.f32.mrb[0].mxu0
    %v254 = vpop.f32.mrb[0].mxu0
    %v255 = vadd.f32 %v109, %v254
    %v256 = vpop.f32.mrb[0].mxu0
    %257 = vdwg.mxu0
    %v258 = vmax.f32 %v252, 0.0
    %v259 = vmax.f32 %v255, 0.0
    %v260 = vpack.c.bf16 %v259, %v258
    %v261 = vld [vmem:[#allocation7] sm:$0xf]
    %v262 = vld [vmem:[#allocation7 + $0x4] sm:$0xf]
    %v263 = vld [vmem:[#allocation7 + $0x8] sm:$0xf]
    %v264 = vld [vmem:[#allocation7 + $0xc] sm:$0xf]
    %v265 = vld [vmem:[#allocation7 + $0x10] sm:$0xf]
    %v266 = vld [vmem:[#allocation7 + $0x14] sm:$0xf]
    %v267 = vld [vmem:[#allocation7 + $0x18] sm:$0xf]
    %v268 = vld [vmem:[#allocation7 + $0x1c] sm:$0xf]
    %v269 = vld [vmem:[#allocation7 + $0x20] sm:$0xf]
    %v270 = vld [vmem:[#allocation7 + $0x24] sm:$0xf]
    %v271 = vld [vmem:[#allocation7 + $0x28] sm:$0xf]
    %v272 = vld [vmem:[#allocation7 + $0x2c] sm:$0xf]
    %v273 = vld [vmem:[#allocation7 + $0x30] sm:$0xf]
    %v274 = vld [vmem:[#allocation7 + $0x34] sm:$0xf]
    %v275 = vld [vmem:[#allocation7 + $0x38] sm:$0xf]
    %v276 = vld [vmem:[#allocation7 + $0x3c] sm:$0xf]
    %v277 = vld [vmem:[%s4] sm:$0x1]
    %v279 = vlaneseq
    %v280 = vshrl.u32 %v279, 7
    %v281 = vsub.s32 0, %v280
    %v282 = vrot.slane %v277, %v281
    %v300 = vunpack.c.l.b16 %v261
    %v301 = vunpack.c.l.b16 %v262
    %v302 = vunpack.c.l.b16 %v263
    %v303 = vunpack.c.l.b16 %v264
    %v304 = vunpack.c.l.b16 %v265
    %v305 = vunpack.c.l.b16 %v266
    %v306 = vunpack.c.l.b16 %v267
    %v307 = vunpack.c.l.b16 %v268
    %v308 = vunpack.c.l.b16 %v269
    %v309 = vunpack.c.l.b16 %v270
    %v310 = vunpack.c.l.b16 %v271
    %v311 = vunpack.c.l.b16 %v272
    %v312 = vunpack.c.l.b16 %v273
    %v313 = vunpack.c.l.b16 %v274
    %v314 = vunpack.c.l.b16 %v275
    %v315 = vunpack.c.l.b16 %v276
    %v316 = vpack.c.b16 %v301, %v300
    %v317 = vpack.c.b16 %v303, %v302
    %v318 = vpack.c.b16 %v305, %v304
    %v319 = vpack.c.b16 %v307, %v306
    %v320 = vpack.c.b16 %v309, %v308
    %v321 = vpack.c.b16 %v311, %v310
    %v322 = vpack.c.b16 %v313, %v312
    %v323 = vpack.c.b16 %v315, %v314
    %332 = vmatprep.subr.bf16.mxu0 0
    %333 = vmatpush1.bf16.msra.mxu0 %v316
    %334 = vmatprep.subr.bf16.mxu0 0
    %335 = vmatpush1.bf16.msra.mxu0 %v317
    %336 = vmatprep.subr.bf16.mxu0 0
    %337 = vmatpush1.bf16.msra.mxu0 %v318
    %338 = vmatprep.subr.bf16.mxu0 0
    %339 = vmatpush1.bf16.msra.mxu0 %v319
    %340 = vmatprep.subr.bf16.mxu0 0
    %341 = vmatpush1.bf16.msra.mxu0 %v320
    %342 = vmatprep.subr.bf16.mxu0 0
    %343 = vmatpush1.bf16.msra.mxu0 %v321
    %344 = vmatprep.subr.bf16.mxu0 0
    %345 = vmatpush1.bf16.msra.mxu0 %v322
    %346 = vmatprep.subr.bf16.mxu0 0
    %347 = vmatpush1.bf16.msra.mxu0 %v323
    %348 = vmatprep.subr.bf16.mxu0 0
    %349 = vmatpush1.bf16.msra.mxu0 0
    %350 = vmatprep.subr.bf16.mxu0 0
    %351 = vmatpush1.bf16.msra.mxu0 0
    %352 = vmatprep.subr.bf16.mxu0 0
    %353 = vmatpush1.bf16.msra.mxu0 0
    %354 = vmatprep.subr.bf16.mxu0 0
    %355 = vmatpush1.bf16.msra.mxu0 0
    %356 = vmatprep.subr.bf16.mxu0 0
    %357 = vmatpush1.bf16.msra.mxu0 0
    %358 = vmatprep.subr.bf16.mxu0 0
    %359 = vmatpush1.bf16.msra.mxu0 0
    %360 = vmatprep.subr.bf16.mxu0 0
    %361 = vmatpush1.bf16.msra.mxu0 0
    %362 = vmatprep.subr.bf16.mxu0 0
    %363 = vmatpush1.bf16.msra.mxu0 0
    %364 = vmatprep.mubr.bf16.mxu0 0
    %365 = vmatmul.mubr.bf16.gmra.mrb[0].mxu0 %v260
    %v366 = vpop.f32.mrb[0].mxu0
    %v367 = vadd.f32 %v282, %v366
    %v368 = vpop.f32.mrb[0].mxu0
    %v369 = vpop.f32.mrb[0].mxu0
    %v370 = vadd.f32 %v282, %v369
    %v371 = vpop.f32.mrb[0].mxu0
    %372 = vdwg.mxu0
    %v373 = vmax.f32 %v367, 0.0
    %v374 = vmax.f32 %v370, 0.0
    %v375 = vld [vmem:[%s5] sm:$0x1]
    %v377 = vlaneseq
    %v378 = vshrl.u32 %v377, 7
    %v379 = vsub.s32 0, %v378
    %v380 = vrot.slane %v375, %v379
    %v382 = vmul.f32 %v373, %v380
    %v383 = vmul.f32 %v374, %v380
    %384 = vadd.xlane.f32.xlu0 %v382
    %v385 = vpop.xlane.xlu0 %384
    %386 = vadd.xlane.f32.xlu0 %v383
    %v387 = vpop.xlane.xlu0 %386
    %v388 = vld [vmem:[#allocation2] sm:$0x1]
    %v390 = vlaneseq
    %v391 = vshrl.u32 %v390, 7
    %v392 = vsub.s32 0, %v391
    %v393 = vrot.slane %v388, %v392
    %v395 = vadd.f32 %v385, %v393
    %v396 = vadd.f32 %v387, %v393
    %v397 = vxor.u32 %v395, 2147483648
    %v398 = vxor.u32 %v396, 2147483648
    %v399 = vmul.f32 %v397, 1.442695
    %v400 = vpow.pop %v399
    %v401 = vmul.f32 %v398, 1.442695
    %v402 = vpow.pop %v401
    %v403 = vadd.f32 %v400, 1.0
    %v404 = vadd.f32 %v402, 1.0
    %v405 = vrcp.pop %v403
    %v406 = vmul.f32 1.0, %v405
    %v407 = vrcp.pop %v404
    %v408 = vmul.f32 1.0, %v407
    %vm409 = vcmask 7168
    %410 = vst.msk [vmem:[%s7] sm:$0xff] %vm409, %v406
    %411 = vst.msk [vmem:[%s7 + $0x8] sm:$0xff] %vm409, %v408
    // Predicated region
    $region42: #{tpu_custom_call.1} parent=1 // pred_check
      _
    $region43: #{tpu_custom_call.1} parent=1 // pred_check_branch
      %413 = sbr.rel (0) target = $region45
    $region44: #{tpu_custom_call.1} parent=1 // pred_region
      _
    $region45: #{tpu_custom_call.1} parent=1 // pred_fallthru
      _
    // Predicated region
    $region46: #{tpu_custom_call.1} parent=1 // pred_check
      _
    $region47: #{tpu_custom_call.1} parent=1 // pred_check_branch
      %415 = sbr.rel (0) target = $region49
    $region48: #{tpu_custom_call.1} parent=1 // pred_region
      _
    $region49: #{tpu_custom_call.1} parent=1 // pred_fallthru
      _
    %416 = vsyncpa [#allocation4], 1
    %417 = vsyncpa [#allocation6], 1

</llo_original>
